<compile_context>
chip_gen: v6e
topology: v6e:2x2x1
jax: 0.10.0
libtpu: 0.0.40
codegen_flags: <defaults>
</compile_context>

<pallas_src>
import functools

import jax
import jax.numpy as jnp
import numpy as np
from jax.experimental import pallas as pl
from jax.experimental.pallas import tpu as pltpu


def _gelu_tanh(x):
    # Matches torch.nn.GELU(approximate='tanh'); evaluated in f32.
    return 0.5 * x * (1.0 + jnp.tanh(0.7978845608028654 * (x + 0.044715 * x * x * x)))


def _round_up(a, b):
    return (a + b - 1) // b * b


def _vmem_cap_bytes():
    # ~80% of physical VMEM: ~102 MiB on v5e/v6e (128 MiB parts), ~51 MiB on v7x (64 MiB).
    try:
        phys = int(pltpu.get_tpu_info().vmem_capacity_bytes)
    except Exception:  # defensive fallback
        phys = 64 << 20
    return int(phys * 0.8)


# ----------------------------- Pallas kernel ------------------------------- #

def _expert_ffn_kernel(count_ref, x_ref, w1_ref, b1_ref, w2_ref, b2_ref, s_ref, o_ref):
    """One (capacity-tile, expert) FFN block: scale * (gelu_tanh(x @ W1 + b1) @ W2 + b2).

    grid = (E, cap_pad // tn). Each block belongs to exactly one expert: no expert
    reduction, no accumulator scratch. count_ref (SMEM, scalar-prefetched) holds the
    per-expert routed-token count; blocks made entirely of zero-pad slots are skipped
    and their output explicitly zeroed.
    """
    e = pl.program_id(0)
    n = pl.program_id(1)
    tn = x_ref.shape[0]
    has_work = n * tn < count_ref[e]

    @pl.when(has_work)
    def _():
        x = x_ref[...]                                                    # (tn, C) bf16
        h = jnp.dot(x, w1_ref[...], preferred_element_type=jnp.float32)  # (tn, H) f32
        h = _gelu_tanh(h + b1_ref[...])
        h = h.astype(w2_ref.dtype)                                        # bf16 for the MXU
        y = jnp.dot(h, w2_ref[...], preferred_element_type=jnp.float32)  # (tn, C) f32
        # Fused combine weight (f32 multiply, then cast). Pad slots have scale 0.
        o_ref[...] = (s_ref[...] * (y + b2_ref[...])).astype(o_ref.dtype)

    @pl.when(jnp.logical_not(has_work))
    def _():
        # Skipped blocks must be zeroed (not stale VMEM) — dropped tokens gather the
        # per-expert pad slot out of this buffer.
        o_ref[...] = jnp.zeros_like(o_ref)


def expert_ffn_pallas(x_disp, counts, slot_scale, w1, b1, w2, b2, *, tn,
                      compute_dtype=jnp.bfloat16, out_dtype=jnp.float32):
    """x_disp: (E, cap_pad, C) tokens already grouped per expert (compute dtype).
    counts: (E,) int32 routed-token count per expert (scalar prefetch).
    slot_scale: (E, cap_pad) f32 top-1 combine weight per slot (0 for pad slots).
    w1: (E, C, H); b1: (E, H); w2: (E, H, C); b2: (E, C)."""
    E, cap_pad, C = x_disp.shape
    H = w1.shape[-1]
    assert cap_pad % tn == 0, "capacity padding must be a multiple of the token tile"
    nb = cap_pad // tn

    # No-op casts when operands are already stored in the compute dtype (preferred path).
    xc = x_disp if x_disp.dtype == compute_dtype else x_disp.astype(compute_dtype)
    w1c = w1 if w1.dtype == compute_dtype else w1.astype(compute_dtype)
    w2c = w2 if w2.dtype == compute_dtype else w2.astype(compute_dtype)
    b1f = b1.reshape(E, 1, H).astype(jnp.float32)
    b2f = b2.reshape(E, 1, C).astype(jnp.float32)
    sf = slot_scale.reshape(E, cap_pad, 1).astype(jnp.float32)

    ib = jnp.dtype(compute_dtype).itemsize
    ob = jnp.dtype(out_dtype).itemsize
    est = ((C * H + H * C) * ib          # single-buffered W1 + W2 (pl.Buffered(1))
           + 2 * tn * C * (ib + ob)      # double-buffered x-in / y-out tiles
           + 2 * tn * 4                  # slot-scale tiles
           + tn * H * 4                  # f32 hidden inside the body
           + (4 << 20))                  # headroom
    vmem_limit = int(min(max(est, 32 << 20), _vmem_cap_bytes()))
    # TODO(synk): for (C, H) so large that even single-buffered weights exceed the VMEM
    # cap, add an H-tiling grid axis (W1 (C,tH), W2 (tH,C), f32 accumulator scratch,
    # init/finalize with pl.when) instead of relying on the limit.

    cost = pl.CostEstimate(
        flops=int(4 * E * cap_pad * C * H),
        transcendentals=int(E * cap_pad * H),
        bytes_accessed=int(E * 2 * C * H * ib + E * cap_pad * C * (ib + ob)
                           + E * cap_pad * 4 + E * (H + C) * 4),
    )

    weights_mode = pl.Buffered(1)   # block index constant over the inner capacity axis

    return pl.pallas_call(
        _expert_ffn_kernel,
        out_shape=jax.ShapeDtypeStruct((E, cap_pad, C), out_dtype),
        grid_spec=pltpu.PrefetchScalarGridSpec(
            num_scalar_prefetch=1,
            grid=(E, nb),
            in_specs=[
                pl.BlockSpec((None, tn, C), lambda e, n, cnt: (e, n, 0)),   # grouped tokens
                pl.BlockSpec((None, C, H), lambda e, n, cnt: (e, 0, 0),     # W1[e]
                             pipeline_mode=weights_mode),
                pl.BlockSpec((None, 1, H), lambda e, n, cnt: (e, 0, 0),     # b1[e]
                             pipeline_mode=weights_mode),
                pl.BlockSpec((None, H, C), lambda e, n, cnt: (e, 0, 0),     # W2[e]
                             pipeline_mode=weights_mode),
                pl.BlockSpec((None, 1, C), lambda e, n, cnt: (e, 0, 0),     # b2[e]
                             pipeline_mode=weights_mode),
                pl.BlockSpec((None, tn, 1), lambda e, n, cnt: (e, n, 0)),   # per-slot scale
            ],
            out_specs=pl.BlockSpec((None, tn, C), lambda e, n, cnt: (e, n, 0)),
        ),
        compiler_params=pltpu.CompilerParams(
            # Split megacore / v7x 2-TC work over the expert axis so each expert's
            # weights stream to exactly one core.
            dimension_semantics=("parallel", "arbitrary"),
            vmem_limit_bytes=vmem_limit,
        ),
        cost_estimate=cost,
    )(counts, xc, w1c, b1f, w2c, b2f, sf)


# --------------------------- full forward pass ------------------------------ #

def switch_moe_forward(x, params, cfg, *, tile_tokens=256, compute_dtype=jnp.bfloat16):
    """tile_tokens: 256 for v6e/v7x (2x256x256 MXU); pass 128 on v5e (128-wide MXU)."""
    B, T, C = x.shape
    E = cfg["n_experts"]
    capacity = cfg["expert_capacity"]
    N = B * T
    x_flat = x.reshape(N, C)

    # ---- gate + routing glue: plain JAX/XLA (tiny, lane-sparse; fuses with aux math).
    gate_logits = jnp.dot(x_flat.astype(jnp.float32), params["wg_t"].astype(jnp.float32))
    if params.get("bg") is not None:
        gate_logits = gate_logits + params["bg"].astype(jnp.float32)

    aux = jnp.float32(0.0)
    if cfg["w_penalty"] > 0:
        p = jax.nn.softmax(gate_logits / 1.66, axis=-1)
        penalty_a = jnp.mean(p * (1.0 - p))
        pm = jnp.mean(p, axis=0)
        penalty_b = 1.0 / E - jnp.mean(pm * (1.0 - pm))
        aux = aux + cfg["w_penalty"] * (penalty_a + penalty_b)
    if cfg["lambda_z"] > 0:
        lse = jax.nn.logsumexp(gate_logits, axis=-1)
        aux = aux + cfg["lambda_z"] * jnp.mean(lse ** 2)

    # Routing kept in f32; only final outputs are in the activation dtype.
    router_probs = jax.nn.softmax(gate_logits, axis=-1)               # (N, E) f32
    top1_weight = jnp.max(router_probs, axis=-1)                      # (N,)   f32
    top1_idx = jnp.argmax(router_probs, axis=-1).astype(jnp.int32)    # (N,)
    top1_onehot = jax.nn.one_hot(top1_idx, E, dtype=jnp.int32)        # (N, E)
    token_priority = jnp.cumsum(top1_onehot, axis=0)                  # (N, E)
    within_capacity = token_priority <= capacity
    expert_index = top1_onehot * within_capacity.astype(jnp.int32)    # (N, E)
    routed = jnp.sum(expert_index, axis=-1) > 0                       # (N,)
    counts = jnp.sum(expert_index, axis=0).astype(jnp.int32)          # (E,) routed per expert

    # TODO(synk): total_assigment_count / total_dropped_count are stateful
    # register_buffer updates (no_grad side effects) — not represented here.

    if cfg["w_load"] > 0:
        f_i = jnp.mean(top1_onehot.astype(jnp.float32), axis=0)
        P_i = jnp.mean(router_probs, axis=0)
        aux = aux + cfg["w_load"] * E * jnp.sum(f_i * P_i)
    if cfg["w_importance"] > 0:
        importance = jnp.sum(top1_onehot.astype(jnp.float32) * top1_weight[:, None], axis=0)
        cv2 = jnp.var(importance) / (jnp.mean(importance) ** 2)
        aux = aux + cfg["w_importance"] * cv2

    # ---- grouped top-1 dispatch: gather each expert's (<= capacity) tokens.
    tt = _round_up(max(int(tile_tokens), 128), 128)
    tn = max(128, min(tt, _round_up(capacity + 1, 128)))   # >=128 rows, multiple of 128
    cap_pad = _round_up(capacity + 1, tn)    # +1 guarantees slot cap_pad-1 is always a zero pad slot
    pos = jnp.sum((token_priority - 1) * top1_onehot, axis=-1)        # slot in chosen expert
    pos_eff = jnp.where(routed, pos, cap_pad)                         # OOB -> dropped by scatter
    slot_token = jnp.full((E, cap_pad), N, dtype=jnp.int32)           # N -> zero-pad row
    slot_token = slot_token.at[top1_idx, pos_eff].set(
        jnp.arange(N, dtype=jnp.int32), mode="drop")
    slot_scale = jnp.zeros((E, cap_pad), jnp.float32)                 # 0 on pad slots
    slot_scale = slot_scale.at[top1_idx, pos_eff].set(top1_weight, mode="drop")

    # Cast x to the compute dtype BEFORE the gather so both the XLA gather and the
    # kernel's x DMA move bf16 rows instead of f32.
    x_flat_c = x_flat.astype(compute_dtype)
    x_padded = jnp.concatenate([x_flat_c, jnp.zeros((1, C), compute_dtype)], axis=0)
    x_disp = x_padded[slot_token.reshape(-1)].reshape(E, cap_pad, C)  # (E, cap_pad, C)
    # TODO(synk): longer-term, fold this gather into the Pallas kernel (slot_token via
    # scalar prefetch, x in memory_space=pl.ANY with async-copy row gather) so x_disp is
    # never materialized in HBM.

    # ---- Pallas: per-expert FFN over the grouped capacity buffer (combine weight fused).
    y_disp = expert_ffn_pallas(
        x_disp, counts, slot_scale,
        params["w1"], params["b1"], params["w2"], params["b2"],
        tn=tn, compute_dtype=compute_dtype, out_dtype=x.dtype)

    # ---- combine: un-permute (scale already applied in-kernel). Dropped tokens read
    # their expert's guaranteed-zero pad slot (cap_pad - 1) -> exact 0, matching the
    # reference's router_probs * zeros.
    flat_slot = top1_idx * cap_pad + jnp.where(routed, pos, cap_pad - 1)
    out_flat = y_disp.reshape(E * cap_pad, C)[flat_slot]              # (N, C)
    return out_flat.reshape(B, T, C), aux


# ----------------------- dense f32 JAX reference ---------------------------- #

def _reference_forward(x, params, cfg):
    B, T, C = x.shape
    E = cfg["n_experts"]
    xf = x.reshape(B * T, C).astype(jnp.float32)
    gl = xf @ params["wg_t"].astype(jnp.float32)
    if params.get("bg") is not None:
        gl = gl + params["bg"].astype(jnp.float32)
    aux = jnp.float32(0.0)
    if cfg["w_penalty"] > 0:
        p = jax.nn.softmax(gl / 1.66, axis=-1)
        pm = jnp.mean(p, axis=0)
        aux = aux + cfg["w_penalty"] * (jnp.mean(p * (1 - p)) + 1.0 / E - jnp.mean(pm * (1 - pm)))
    if cfg["lambda_z"] > 0:
        aux = aux + cfg["lambda_z"] * jnp.mean(jax.nn.logsumexp(gl, axis=-1) ** 2)
    rp = jax.nn.softmax(gl, axis=-1)
    w = jnp.max(rp, axis=-1)
    idx = jnp.argmax(rp, axis=-1)
    oh = jax.nn.one_hot(idx, E, dtype=jnp.int32)
    prio = jnp.cumsum(oh, axis=0)
    ei = oh * (prio <= cfg["expert_capacity"]).astype(jnp.int32)
    if cfg["w_load"] > 0:
        aux = aux + cfg["w_load"] * E * jnp.sum(jnp.mean(oh.astype(jnp.float32), 0) * jnp.mean(rp, 0))
    if cfg["w_importance"] > 0:
        imp = jnp.sum(oh.astype(jnp.float32) * w[:, None], axis=0)
        aux = aux + cfg["w_importance"] * (jnp.var(imp) / jnp.mean(imp) ** 2)
    h = jnp.einsum("nc,ech->enh", xf, params["w1"].astype(jnp.float32),
                   precision=jax.lax.Precision.HIGHEST) + params["b1"][:, None, :]
    h = _gelu_tanh(h)
    y = jnp.einsum("enh,ehc->enc", h, params["w2"].astype(jnp.float32),
                   precision=jax.lax.Precision.HIGHEST) + params["b2"][:, None, :]
    next_states = jnp.sum(ei.T[:, :, None].astype(jnp.float32) * y, axis=0)   # (N, C)
    out = (w[:, None] * next_states).reshape(B, T, C)
    return out.astype(x.dtype), aux


# --------------------------------- main ------------------------------------ #

if __name__ == "__main__":
    B, T = 2, 8
    n_embd = 32
    n_experts = 4
    cfg = dict(
        n_experts=n_experts,
        expert_capacity=6,
        w_importance=0.01,
        w_load=0.01,
        lambda_z=0.001,
        w_penalty=0.01,
    )
    H = 4 * n_embd

    key = jax.random.PRNGKey(0)
    ks = jax.random.split(key, 8)
    params = {
        # gate: nn.Linear(n_embd, n_experts, bias=False) -> weight (E, C); stored as W^T.
        "wg_t": 0.02 * jax.random.normal(ks[0], (n_embd, n_experts), jnp.float32),
        # separate routing bias Parameter (config.bias=True in this demo).
        "bg": 0.02 * jax.random.normal(ks[1], (n_experts,), jnp.float32),
        # per-expert FFN: c_fc (C -> 4C), c_proj (4C -> C), stacked over experts, pre-transposed.
        "w1": 0.02 * jax.random.normal(ks[2], (n_experts, n_embd, H), jnp.float32),
        "b1": 0.02 * jax.random.normal(ks[3], (n_experts, H), jnp.float32),
        "w2": 0.02 * jax.random.normal(ks[4], (n_experts, H, n_embd), jnp.float32),
        "b2": 0.02 * jax.random.normal(ks[5], (n_experts, n_embd), jnp.float32),
    }
    x = jax.random.normal(ks[6], (B, T, n_embd), jnp.float32)

    # Pre-cast expert matmul weights to the MXU compute dtype ONCE at setup, so the
    # forward pass never re-materializes bf16 weight copies in HBM.
    params_run = dict(params)
    params_run["w1"] = params["w1"].astype(jnp.bfloat16)
    params_run["w2"] = params["w2"].astype(jnp.bfloat16)

    fwd = jax.jit(functools.partial(switch_moe_forward, cfg=cfg))
    x2, aux_loss = fwd(x, params_run)
    x2, aux_loss = jax.block_until_ready((x2, aux_loss))

    ref_out, ref_aux = _reference_forward(x, params, cfg)
    # bf16 MXU compute with f32 accumulation vs f32 HIGHEST reference.
    np.testing.assert_allclose(np.asarray(x2), np.asarray(ref_out), rtol=5e-2, atol=5e-3)
    np.testing.assert_allclose(float(aux_loss), float(ref_aux), rtol=1e-4, atol=1e-5)

    assert x2.shape == (B, T, n_embd)
    assert np.isfinite(float(aux_loss))
    print("KERNEL_OK")
</pallas_src>

<mosaic_0001>
module attributes {stable_mosaic.version = 11 : i64} {
  func.func @_expert_ffn_kernel(%arg0: i32, %arg1: i32, %arg2: memref<4xi32, #tpu.memory_space<smem>>, %arg3: memref<1x128x32xbf16, #tpu.memory_space<vmem>>, %arg4: memref<1x32x128xbf16, #tpu.memory_space<vmem>>, %arg5: memref<1x1x128xf32, #tpu.memory_space<vmem>>, %arg6: memref<1x128x32xbf16, #tpu.memory_space<vmem>>, %arg7: memref<1x1x32xf32, #tpu.memory_space<vmem>>, %arg8: memref<1x128x1xf32, #tpu.memory_space<vmem>>, %arg9: memref<1x128x32xf32, #tpu.memory_space<vmem>>) attributes {dimension_semantics = [#tpu.dimension_semantics<parallel>, #tpu.dimension_semantics<arbitrary>], iteration_bounds = array<i64: 4, 1>, scalar_prefetch = 1 : i64, scratch_operands = 0 : i64, tpu.core_type = #tpu.core_type<tc>, window_params = [{transform_indices = @transform_0, window_bounds = array<i64: 1, 128, 32>}, {pipeline_mode = #tpu.pipeline_mode<synchronous>, transform_indices = @transform_1, window_bounds = array<i64: 1, 32, 128>}, {pipeline_mode = #tpu.pipeline_mode<synchronous>, transform_indices = @transform_2, window_bounds = array<i64: 1, 1, 128>}, {pipeline_mode = #tpu.pipeline_mode<synchronous>, transform_indices = @transform_3, window_bounds = array<i64: 1, 128, 32>}, {pipeline_mode = #tpu.pipeline_mode<synchronous>, transform_indices = @transform_4, window_bounds = array<i64: 1, 1, 32>}, {transform_indices = @transform_5, window_bounds = array<i64: 1, 128, 1>}, {transform_indices = @transform_6, window_bounds = array<i64: 1, 128, 32>}]} {
    %c128_i32 = arith.constant 128 : i32
    %0 = arith.muli %arg1, %c128_i32 : i32
    %1 = arith.index_cast %arg0 : i32 to index
    %2 = memref.load %arg2[%1] : memref<4xi32, #tpu.memory_space<smem>>
    %3 = arith.cmpi slt, %0, %2 : i32
    %4 = arith.extui %3 : i1 to i32
    %c0_i32 = arith.constant 0 : i32
    %5 = arith.cmpi ne, %4, %c0_i32 : i32
    scf.if %5 {
      %c0 = arith.constant 0 : index
      %c0_1 = arith.constant 0 : index
      %c0_2 = arith.constant 0 : index
      %9 = vector.load %arg3[%c0, %c0_1, %c0_2] : memref<1x128x32xbf16, #tpu.memory_space<vmem>>, vector<1x128x32xbf16>
      %10 = vector.shape_cast %9 : vector<1x128x32xbf16> to vector<128x32xbf16>
      %c0_3 = arith.constant 0 : index
      %c0_4 = arith.constant 0 : index
      %c0_5 = arith.constant 0 : index
      %11 = vector.load %arg4[%c0_3, %c0_4, %c0_5] : memref<1x32x128xbf16, #tpu.memory_space<vmem>>, vector<1x32x128xbf16>
      %12 = vector.shape_cast %11 : vector<1x32x128xbf16> to vector<32x128xbf16>
      %cst = arith.constant dense<0.000000e+00> : vector<128x128xf32>
      %13 = tpu.matmul %10, %12, %cst {dimension_numbers = #tpu.dot_dimension_numbers<[1], [0], [0], [1], [0, 0, 1, 1], [], []>} : vector<128x32xbf16>, vector<32x128xbf16>, vector<128x128xf32> -> vector<128x128xf32>
      %c0_6 = arith.constant 0 : index
      %c0_7 = arith.constant 0 : index
      %c0_8 = arith.constant 0 : index
      %14 = vector.load %arg5[%c0_6, %c0_7, %c0_8] : memref<1x1x128xf32, #tpu.memory_space<vmem>>, vector<1x1x128xf32>
      %15 = vector.shape_cast %14 : vector<1x1x128xf32> to vector<1x128xf32>
      %16 = vector.broadcast %15 : vector<1x128xf32> to vector<128x128xf32>
      %17 = arith.addf %13, %16 : vector<128x128xf32>
      %cst_9 = arith.constant 5.000000e-01 : f32
      %18 = vector.broadcast %cst_9 : f32 to vector<128x128xf32>
      %19 = arith.mulf %18, %17 : vector<128x128xf32>
      %cst_10 = arith.constant 4.471500e-02 : f32
      %20 = vector.broadcast %cst_10 : f32 to vector<128x128xf32>
      %21 = arith.mulf %20, %17 : vector<128x128xf32>
      %22 = arith.mulf %21, %17 : vector<128x128xf32>
      %23 = arith.mulf %22, %17 : vector<128x128xf32>
      %24 = arith.addf %17, %23 : vector<128x128xf32>
      %cst_11 = arith.constant 0.797884583 : f32
      %25 = vector.broadcast %cst_11 : f32 to vector<128x128xf32>
      %26 = arith.mulf %25, %24 : vector<128x128xf32>
      %27 = math.tanh %26 : vector<128x128xf32>
      %cst_12 = arith.constant 1.000000e+00 : f32
      %28 = vector.broadcast %cst_12 : f32 to vector<128x128xf32>
      %29 = arith.addf %28, %27 : vector<128x128xf32>
      %30 = arith.mulf %19, %29 : vector<128x128xf32>
      %31 = arith.truncf %30 : vector<128x128xf32> to vector<128x128xbf16>
      %c0_13 = arith.constant 0 : index
      %c0_14 = arith.constant 0 : index
      %c0_15 = arith.constant 0 : index
      %32 = vector.load %arg6[%c0_13, %c0_14, %c0_15] : memref<1x128x32xbf16, #tpu.memory_space<vmem>>, vector<1x128x32xbf16>
      %33 = vector.shape_cast %32 : vector<1x128x32xbf16> to vector<128x32xbf16>
      %cst_16 = arith.constant dense<0.000000e+00> : vector<128x32xf32>
      %34 = tpu.matmul %31, %33, %cst_16 {dimension_numbers = #tpu.dot_dimension_numbers<[1], [0], [0], [1], [0, 0, 1, 1], [], []>} : vector<128x128xbf16>, vector<128x32xbf16>, vector<128x32xf32> -> vector<128x32xf32>
      %c0_17 = arith.constant 0 : index
      %c0_18 = arith.constant 0 : index
      %c0_19 = arith.constant 0 : index
      %35 = vector.load %arg8[%c0_17, %c0_18, %c0_19] : memref<1x128x1xf32, #tpu.memory_space<vmem>>, vector<1x128x1xf32>
      %36 = vector.shape_cast %35 : vector<1x128x1xf32> to vector<128x1xf32>
      %c0_20 = arith.constant 0 : index
      %c0_21 = arith.constant 0 : index
      %c0_22 = arith.constant 0 : index
      %37 = vector.load %arg7[%c0_20, %c0_21, %c0_22] : memref<1x1x32xf32, #tpu.memory_space<vmem>>, vector<1x1x32xf32>
      %38 = vector.shape_cast %37 : vector<1x1x32xf32> to vector<1x32xf32>
      %39 = vector.broadcast %38 : vector<1x32xf32> to vector<128x32xf32>
      %40 = arith.addf %34, %39 : vector<128x32xf32>
      %41 = vector.broadcast %36 : vector<128x1xf32> to vector<128x32xf32>
      %42 = arith.mulf %41, %40 : vector<128x32xf32>
      %c0_23 = arith.constant 0 : index
      %c0_24 = arith.constant 0 : index
      %c0_25 = arith.constant 0 : index
      %43 = vector.load %arg9[%c0_23, %c0_24, %c0_25] : memref<1x128x32xf32, #tpu.memory_space<vmem>>, vector<1x128x32xf32>
      %44 = vector.shape_cast %43 : vector<1x128x32xf32> to vector<128x32xf32>
      %45 = vector.shape_cast %42 : vector<128x32xf32> to vector<1x128x32xf32>
      tpu.vector_store %arg9[%c0_23, %c0_24, %c0_25], %45 {strides = array<i32>} : memref<1x128x32xf32, #tpu.memory_space<vmem>>, vector<1x128x32xf32>,
    } else {
    }
    %true = arith.constant true
    %6 = arith.xori %3, %true : i1
    %7 = arith.extui %6 : i1 to i32
    %c0_i32_0 = arith.constant 0 : i32
    %8 = arith.cmpi ne, %7, %c0_i32_0 : i32
    scf.if %8 {
      %cst = arith.constant 0.000000e+00 : f32
      %9 = vector.broadcast %cst : f32 to vector<128x32xf32>
      %c0 = arith.constant 0 : index
      %c0_1 = arith.constant 0 : index
      %c0_2 = arith.constant 0 : index
      %10 = vector.load %arg9[%c0, %c0_1, %c0_2] : memref<1x128x32xf32, #tpu.memory_space<vmem>>, vector<1x128x32xf32>
      %11 = vector.shape_cast %10 : vector<1x128x32xf32> to vector<128x32xf32>
      %12 = vector.shape_cast %9 : vector<128x32xf32> to vector<1x128x32xf32>
      tpu.vector_store %arg9[%c0, %c0_1, %c0_2], %12 {strides = array<i32>} : memref<1x128x32xf32, #tpu.memory_space<vmem>>, vector<1x128x32xf32>,
    } else {
    }
    return
  }
  func.func @transform_0(%arg0: i32, %arg1: i32, %arg2: memref<4xi32, #tpu.memory_space<smem>>) -> (i32, i32, i32) {
    %c0_i32 = arith.constant 0 : i32
    %c0_i32_0 = arith.constant 0 : i32
    return %arg0, %arg1, %c0_i32 : i32, i32, i32
  }
  func.func @transform_1(%arg0: i32, %arg1: i32, %arg2: memref<4xi32, #tpu.memory_space<smem>>) -> (i32, i32, i32) {
    %c0_i32 = arith.constant 0 : i32
    %c0_i32_0 = arith.constant 0 : i32
    %c0_i32_1 = arith.constant 0 : i32
    return %arg0, %c0_i32, %c0_i32_0 : i32, i32, i32
  }
  func.func @transform_2(%arg0: i32, %arg1: i32, %arg2: memref<4xi32, #tpu.memory_space<smem>>) -> (i32, i32, i32) {
    %c0_i32 = arith.constant 0 : i32
    %c0_i32_0 = arith.constant 0 : i32
    %c0_i32_1 = arith.constant 0 : i32
    return %arg0, %c0_i32, %c0_i32_0 : i32, i32, i32
  }
  func.func @transform_3(%arg0: i32, %arg1: i32, %arg2: memref<4xi32, #tpu.memory_space<smem>>) -> (i32, i32, i32) {
    %c0_i32 = arith.constant 0 : i32
    %c0_i32_0 = arith.constant 0 : i32
    %c0_i32_1 = arith.constant 0 : i32
    return %arg0, %c0_i32, %c0_i32_0 : i32, i32, i32
  }
  func.func @transform_4(%arg0: i32, %arg1: i32, %arg2: memref<4xi32, #tpu.memory_space<smem>>) -> (i32, i32, i32) {
    %c0_i32 = arith.constant 0 : i32
    %c0_i32_0 = arith.constant 0 : i32
    %c0_i32_1 = arith.constant 0 : i32
    return %arg0, %c0_i32, %c0_i32_0 : i32, i32, i32
  }
  func.func @transform_5(%arg0: i32, %arg1: i32, %arg2: memref<4xi32, #tpu.memory_space<smem>>) -> (i32, i32, i32) {
    %c0_i32 = arith.constant 0 : i32
    %c0_i32_0 = arith.constant 0 : i32
    return %arg0, %arg1, %c0_i32 : i32, i32, i32
  }
  func.func @transform_6(%arg0: i32, %arg1: i32, %arg2: memref<4xi32, #tpu.memory_space<smem>>) -> (i32, i32, i32) {
    %c0_i32 = arith.constant 0 : i32
    %c0_i32_0 = arith.constant 0 : i32
    return %arg0, %arg1, %c0_i32 : i32, i32, i32
  }
}

</mosaic_0001>

<llo_original>
// kernel: switch_moe_forward.1
$region0: #{switch_moe_forward.1}
  #allocation0 [shape = 'u32[]', space=smem, size = 0x4, offset = 0x4, fixed_abs, tag = 'smem constant byte address 0x4 - core index']
  #allocation1 [shape = 'u32[144,128]{1,0:T(1,128)}', space=vmem, size = 0x12000, scoped, tag = 'internal scratch']
  #allocation2 [shape = 's32[1]{0}', space=sflag, size = 0x4, scoped, tag = 'scoped memory for switch_moe_forward.1']
  #allocation3 [shape = 'u8[512]{0}', space=smem, size = 0x200, scoped, tag = 'prefetched SMEM operand 0']
  %s0 = inlined_call_operand.vmem [shape: s32[4], index: 0, kind: input, shape index: {}]
  %s1 = inlined_call_operand.vmem [shape: bf16[4,128,32], index: 1, kind: input, shape index: {}]
  %s2 = inlined_call_operand.vmem [shape: bf16[4,32,128], index: 2, kind: input, shape index: {}]
  %s3 = inlined_call_operand.vmem [shape: f32[4,1,128], index: 3, kind: input, shape index: {}]
  %s4 = inlined_call_operand.vmem [shape: bf16[4,128,32], index: 4, kind: input, shape index: {}]
  %s5 = inlined_call_operand.vmem [shape: f32[4,1,32], index: 5, kind: input, shape index: {}]
  %s6 = inlined_call_operand.vmem [shape: f32[4,128,1], index: 6, kind: input, shape index: {}]
  %s7 = inlined_call_operand.vmem [shape: f32[4,128,32], index: 7, kind: output, shape index: {}]
  %s8 = sld [smem:[#allocation0]]
  $region65: #{switch_moe_forward.1} parent=0
    _
  %s10 = ssub.s32 1, %s8
  %s11 = scalar_select 0, %s10, %s8
  %s12 = sshll.u32 %s0, 4
  %s13 = int_to_ptr.vmem [resolvable:$true] %s12
  %15 = dma.vmem_to_smem %s13, 16, [#allocation3], [#allocation2]
  %16 = dma.done [#allocation2], 16
  %17 = sfence
  loop: start=0, step=1, limit=6
  $region2: #{switch_moe_forward.1} parent=0 // loop_pre_header
    _
  $region3: #{switch_moe_forward.1} parent=0 // loop_header
    %s19 = sphi 0, %s23
    %p20 = scmp.ge.s32.totalorder %s19, 6
    %s26 = sphi 0, %s38
    %s27 = sphi 0, %s34
    %s28 = sphi 0, %s26
    %s29 = sphi 0, %s27
    %s30 = sphi 0, %s28
    %s31 = sphi 0, %s29
    %s43 = sphi 0, %s45
    %s46 = sphi 0, %s43
    %s47 = sphi 0, %s46
    %s63 = sphi 0, %s47
    %s69 = sphi 0, %s71
    %s72 = sphi 0, %s69
    %s73 = sphi 0, %s72
    %s89 = sphi 0, %s73
    %s95 = sphi 0, %s97
    %s98 = sphi 0, %s95
    %s99 = sphi 0, %s98
    %s115 = sphi 0, %s99
    %s121 = sphi 0, %s123
    %s124 = sphi 0, %s121
    %s125 = sphi 0, %s124
    %s141 = sphi 0, %s125
    %s147 = sphi 0, %s149
    %s150 = sphi 0, %s147
    %s151 = sphi 0, %s150
    %s167 = sphi 0, %s151
    %s175 = sphi 0, %s177
    %s178 = sphi 0, %s175
    %s179 = sphi 0, %s178
    %s195 = sphi 0, %s179
    %s203 = sphi 0, %s205
    %s206 = sphi 0, %s203
    %s207 = sphi 0, %s206
    %s223 = sphi 0, %s207
  $region4: #{switch_moe_forward.1} parent=0 // loop_header_branch
    %22 = sbr.rel (%p20) target = $region8
  $region5: #{switch_moe_forward.1} parent=0 // loop_body
    %s24 = ssub.s32 %s19, 1
    %s25 = ssub.s32 %s19, 2
    %s32 = sadd.s32 1, %s27
    %p33 = scmp.ge.s32.totalorder %s32, 1
    %s34 = scalar_select %p33, 0, %s32
    %s35 = sadd.s32 1, %s26
    %s36 = scalar_select %p33, %s35, %s26
    %p37 = scmp.ge.s32.totalorder %s36, 4
    %s38 = scalar_select %p37, 0, %s36
    %s39 = ssub.s32 %s26, %s38
    %s40 = ssub.s32 %s27, %s34
    %s41 = sor.u32 %s39, %s40
    %p42 = scmp.eq.s32.totalorder %s41, 0
    %s44 = sadd.s32 %s43, 1
    %s45 = scalar_select %p42, %s43, %s44
    %p48 = pneg %p42
    %p49 = scmp.eq.s32.totalorder %s19, 3
    %p50 = por %p48, %p49
    %p51 = scmp.ne.s32.totalorder %s43, %s46
    %p52 = scmp.eq.s32.totalorder %s19, 0
    %p53 = por %p51, %p52
    %p54 = scmp.ne.s32.totalorder %s43, %s46
    %p55 = scmp.eq.s32.totalorder %s24, 3
    %p56 = por %p54, %p55
    %p57 = scmp.ne.s32.totalorder %s46, %s47
    %p58 = scmp.eq.s32.totalorder %s24, 0
    %p59 = por %p57, %p58
    %p60 = scmp.ne.s32.totalorder %s46, %s47
    %p61 = scmp.eq.s32.totalorder %s25, 3
    %p62 = por %p60, %p61
    %p64 = scmp.ne.s32.totalorder %s47, %s63
    %p65 = scmp.eq.s32.totalorder %s25, 0
    %p66 = por %p64, %p65
    %s67 = ssub.s32 %s26, %s38
    %p68 = scmp.eq.s32.totalorder %s67, 0
    %s70 = sadd.s32 %s69, 1
    %s71 = scalar_select %p68, %s69, %s70
    %p74 = pneg %p68
    %p75 = scmp.eq.s32.totalorder %s19, 3
    %p76 = por %p74, %p75
    %p77 = scmp.ne.s32.totalorder %s69, %s72
    %p78 = scmp.eq.s32.totalorder %s19, 0
    %p79 = por %p77, %p78
    %p80 = scmp.ne.s32.totalorder %s69, %s72
    %p81 = scmp.eq.s32.totalorder %s24, 3
    %p82 = por %p80, %p81
    %p83 = scmp.ne.s32.totalorder %s72, %s73
    %p84 = scmp.eq.s32.totalorder %s24, 0
    %p85 = por %p83, %p84
    %p86 = scmp.ne.s32.totalorder %s72, %s73
    %p87 = scmp.eq.s32.totalorder %s25, 3
    %p88 = por %p86, %p87
    %p90 = scmp.ne.s32.totalorder %s73, %s89
    %p91 = scmp.eq.s32.totalorder %s25, 0
    %p92 = por %p90, %p91
    %s93 = ssub.s32 %s26, %s38
    %p94 = scmp.eq.s32.totalorder %s93, 0
    %s96 = sadd.s32 %s95, 1
    %s97 = scalar_select %p94, %s95, %s96
    %p100 = pneg %p94
    %p101 = scmp.eq.s32.totalorder %s19, 3
    %p102 = por %p100, %p101
    %p103 = scmp.ne.s32.totalorder %s95, %s98
    %p104 = scmp.eq.s32.totalorder %s19, 0
    %p105 = por %p103, %p104
    %p106 = scmp.ne.s32.totalorder %s95, %s98
    %p107 = scmp.eq.s32.totalorder %s24, 3
    %p108 = por %p106, %p107
    %p109 = scmp.ne.s32.totalorder %s98, %s99
    %p110 = scmp.eq.s32.totalorder %s24, 0
    %p111 = por %p109, %p110
    %p112 = scmp.ne.s32.totalorder %s98, %s99
    %p113 = scmp.eq.s32.totalorder %s25, 3
    %p114 = por %p112, %p113
    %p116 = scmp.ne.s32.totalorder %s99, %s115
    %p117 = scmp.eq.s32.totalorder %s25, 0
    %p118 = por %p116, %p117
    %s119 = ssub.s32 %s26, %s38
    %p120 = scmp.eq.s32.totalorder %s119, 0
    %s122 = sadd.s32 %s121, 1
    %s123 = scalar_select %p120, %s121, %s122
    %p126 = pneg %p120
    %p127 = scmp.eq.s32.totalorder %s19, 3
    %p128 = por %p126, %p127
    %p129 = scmp.ne.s32.totalorder %s121, %s124
    %p130 = scmp.eq.s32.totalorder %s19, 0
    %p131 = por %p129, %p130
    %p132 = scmp.ne.s32.totalorder %s121, %s124
    %p133 = scmp.eq.s32.totalorder %s24, 3
    %p134 = por %p132, %p133
    %p135 = scmp.ne.s32.totalorder %s124, %s125
    %p136 = scmp.eq.s32.totalorder %s24, 0
    %p137 = por %p135, %p136
    %p138 = scmp.ne.s32.totalorder %s124, %s125
    %p139 = scmp.eq.s32.totalorder %s25, 3
    %p140 = por %p138, %p139
    %p142 = scmp.ne.s32.totalorder %s125, %s141
    %p143 = scmp.eq.s32.totalorder %s25, 0
    %p144 = por %p142, %p143
    %s145 = ssub.s32 %s26, %s38
    %p146 = scmp.eq.s32.totalorder %s145, 0
    %s148 = sadd.s32 %s147, 1
    %s149 = scalar_select %p146, %s147, %s148
    %p152 = pneg %p146
    %p153 = scmp.eq.s32.totalorder %s19, 3
    %p154 = por %p152, %p153
    %p155 = scmp.ne.s32.totalorder %s147, %s150
    %p156 = scmp.eq.s32.totalorder %s19, 0
    %p157 = por %p155, %p156
    %p158 = scmp.ne.s32.totalorder %s147, %s150
    %p159 = scmp.eq.s32.totalorder %s24, 3
    %p160 = por %p158, %p159
    %p161 = scmp.ne.s32.totalorder %s150, %s151
    %p162 = scmp.eq.s32.totalorder %s24, 0
    %p163 = por %p161, %p162
    %p164 = scmp.ne.s32.totalorder %s150, %s151
    %p165 = scmp.eq.s32.totalorder %s25, 3
    %p166 = por %p164, %p165
    %p168 = scmp.ne.s32.totalorder %s151, %s167
    %p169 = scmp.eq.s32.totalorder %s25, 0
    %p170 = por %p168, %p169
    %s171 = ssub.s32 %s26, %s38
    %s172 = ssub.s32 %s27, %s34
    %s173 = sor.u32 %s171, %s172
    %p174 = scmp.eq.s32.totalorder %s173, 0
    %s176 = sadd.s32 %s175, 1
    %s177 = scalar_select %p174, %s175, %s176
    %p180 = pneg %p174
    %p181 = scmp.eq.s32.totalorder %s19, 3
    %p182 = por %p180, %p181
    %p183 = scmp.ne.s32.totalorder %s175, %s178
    %p184 = scmp.eq.s32.totalorder %s19, 0
    %p185 = por %p183, %p184
    %p186 = scmp.ne.s32.totalorder %s175, %s178
    %p187 = scmp.eq.s32.totalorder %s24, 3
    %p188 = por %p186, %p187
    %p189 = scmp.ne.s32.totalorder %s178, %s179
    %p190 = scmp.eq.s32.totalorder %s24, 0
    %p191 = por %p189, %p190
    %p192 = scmp.ne.s32.totalorder %s178, %s179
    %p193 = scmp.eq.s32.totalorder %s25, 3
    %p194 = por %p192, %p193
    %p196 = scmp.ne.s32.totalorder %s179, %s195
    %p197 = scmp.eq.s32.totalorder %s25, 0
    %p198 = por %p196, %p197
    %s199 = ssub.s32 %s26, %s38
    %s200 = ssub.s32 %s27, %s34
    %s201 = sor.u32 %s199, %s200
    %p202 = scmp.eq.s32.totalorder %s201, 0
    %s204 = sadd.s32 %s203, 1
    %s205 = scalar_select %p202, %s203, %s204
    %p208 = pneg %p202
    %p209 = scmp.eq.s32.totalorder %s19, 3
    %p210 = por %p208, %p209
    %p211 = scmp.ne.s32.totalorder %s203, %s206
    %p212 = scmp.eq.s32.totalorder %s19, 0
    %p213 = por %p211, %p212
    %p214 = scmp.ne.s32.totalorder %s203, %s206
    %p215 = scmp.eq.s32.totalorder %s24, 3
    %p216 = por %p214, %p215
    %p217 = scmp.ne.s32.totalorder %s206, %s207
    %p218 = scmp.eq.s32.totalorder %s24, 0
    %p219 = por %p217, %p218
    %p220 = scmp.ne.s32.totalorder %s206, %s207
    %p221 = scmp.eq.s32.totalorder %s25, 3
    %p222 = por %p220, %p221
    %p224 = scmp.ne.s32.totalorder %s207, %s223
    %p225 = scmp.eq.s32.totalorder %s25, 0
    %p226 = por %p224, %p225
    %p227 = scmp.le.s32.totalorder 1, %s19
    %p228 = scmp.lt.s32.totalorder %s19, 5
    %p229 = pnand %p227, %p228
    %p230 = pneg %p229
    // Predicated region
    $region9: #{switch_moe_forward.1} parent=5 // pred_check
      _
    $region10: #{switch_moe_forward.1} parent=5 // pred_check_branch
      %232 = sbr.rel (%p229) target = $region12
    $region11: #{switch_moe_forward.1} parent=5 // pred_region
      %s233 = ssub.s32 %s19, 1
      // Predicated region
      $region13: #{switch_moe_forward.1} parent=11 // pred_check
        %p234 = pneg %p85
      $region14: #{switch_moe_forward.1} parent=11 // pred_check_branch
        %236 = sbr.rel (%p234) target = $region16
      $region15: #{switch_moe_forward.1} parent=11 // pred_region
        %p237 = scmp.lt.s32.totalorder %s28, 3
        %s238 = scalar_select %p237, %s28, 3
        %s239 = smul.addr %s238, 4
        %s240 = smul.addr %s239, 4
        %s241 = scalar_lea.vmem %s2, %s240
      $region16: #{switch_moe_forward.1} parent=11 // pred_fallthru
        _
      // Predicated region
      $region17: #{switch_moe_forward.1} parent=11 // pred_check
        %p242 = pneg %p111
      $region18: #{switch_moe_forward.1} parent=11 // pred_check_branch
        %244 = sbr.rel (%p242) target = $region20
      $region19: #{switch_moe_forward.1} parent=11 // pred_region
        %p245 = scmp.lt.s32.totalorder %s28, 3
        %s246 = scalar_select %p245, %s28, 3
        %s247 = scalar_lea.vmem %s3, %s246
      $region20: #{switch_moe_forward.1} parent=11 // pred_fallthru
        _
      // Predicated region
      $region21: #{switch_moe_forward.1} parent=11 // pred_check
        %p248 = pneg %p137
      $region22: #{switch_moe_forward.1} parent=11 // pred_check_branch
        %250 = sbr.rel (%p248) target = $region24
      $region23: #{switch_moe_forward.1} parent=11 // pred_region
        %p251 = scmp.lt.s32.totalorder %s28, 3
        %s252 = scalar_select %p251, %s28, 3
        %s253 = smul.addr %s252, 16
        %s254 = smul.addr %s253, 4
        %s255 = scalar_lea.vmem %s4, %s254
      $region24: #{switch_moe_forward.1} parent=11 // pred_fallthru
        _
      // Predicated region
      $region25: #{switch_moe_forward.1} parent=11 // pred_check
        %p256 = pneg %p163
      $region26: #{switch_moe_forward.1} parent=11 // pred_check_branch
        %258 = sbr.rel (%p256) target = $region28
      $region27: #{switch_moe_forward.1} parent=11 // pred_region
        %p259 = scmp.lt.s32.totalorder %s28, 3
        %s260 = scalar_select %p259, %s28, 3
        %s261 = scalar_lea.vmem %s5, %s260
      $region28: #{switch_moe_forward.1} parent=11 // pred_fallthru
        _
    $region12: #{switch_moe_forward.1} parent=5 // pred_fallthru
      _
    %p262 = scmp.lt.s32.totalorder %s19, 4
    // Predicated region
    $region29: #{switch_moe_forward.1} parent=5 // pred_check
      %p263 = pneg %p262
    $region30: #{switch_moe_forward.1} parent=5 // pred_check_branch
      %265 = sbr.rel (%p263) target = $region32
    $region31: #{switch_moe_forward.1} parent=5 // pred_region
      // Predicated region
      $region33: #{switch_moe_forward.1} parent=31 // pred_check
        %p266 = pneg %p53
      $region34: #{switch_moe_forward.1} parent=31 // pred_check_branch
        %268 = sbr.rel (%p266) target = $region36
      $region35: #{switch_moe_forward.1} parent=31 // pred_region
        %s269 = smul.u32 16, %s27
        %p270 = scmp.lt.s32.totalorder %s26, 3
        %s271 = scalar_select %p270, %s26, 3
        %p272 = scmp.lt.s32.totalorder %s269, 15
        %s273 = scalar_select %p272, %s269, 15
        %s274 = smul.addr %s271, 16
        %s275 = sadd.s32 %s273, %s274
        %s276 = smul.addr %s275, 4
        %s277 = scalar_lea.vmem %s1, %s276
        %s278 = smul.u32 16, %s27
      $region36: #{switch_moe_forward.1} parent=31 // pred_fallthru
        _
      // Predicated region
      $region37: #{switch_moe_forward.1} parent=31 // pred_check
        %p279 = pneg %p185
      $region38: #{switch_moe_forward.1} parent=31 // pred_check_branch
        %281 = sbr.rel (%p279) target = $region40
      $region39: #{switch_moe_forward.1} parent=31 // pred_region
        %s282 = smul.u32 16, %s27
        %p283 = scmp.lt.s32.totalorder %s26, 3
        %s284 = scalar_select %p283, %s26, 3
        %p285 = scmp.lt.s32.totalorder %s282, 15
        %s286 = scalar_select %p285, %s282, 15
        %s287 = smul.addr %s284, 16
        %s288 = sadd.s32 %s286, %s287
        %s289 = smul.addr %s288, 8
        %s290 = scalar_lea.vmem %s6, %s289
        %s291 = smul.u32 16, %s27
      $region40: #{switch_moe_forward.1} parent=31 // pred_fallthru
        _
    $region32: #{switch_moe_forward.1} parent=5 // pred_fallthru
      _
    %p292 = scmp.le.s32.totalorder 1, %s19
    %p293 = scmp.lt.s32.totalorder %s19, 5
    %p294 = pnand %p292, %p293
    %p295 = pneg %p294
    // Predicated region
    $region41: #{switch_moe_forward.1} parent=5 // pred_check
      _
    $region42: #{switch_moe_forward.1} parent=5 // pred_check_branch
      %297 = sbr.rel (%p294) target = $region44
    $region43: #{switch_moe_forward.1} parent=5 // pred_region
      %s298 = ssub.s32 %s19, 1
      %s299 = smul.u32 16, %s29
      %p300 = scmp.lt.s32.totalorder %s28, 3
      %s301 = scalar_select %p300, %s28, 3
      %p302 = scmp.lt.s32.totalorder %s299, 15
      %s303 = scalar_select %p302, %s299, 15
      %s304 = smul.addr %s301, 16
      %s305 = sadd.s32 %s303, %s304
      %s306 = smul.addr %s305, 4
      %s307 = scalar_lea.vmem %s1, %s306
      %p308 = pneg %p59
      %p309 = pneg %p56
      %p310 = scmp.lt.s32.totalorder %s28, 3
      %s311 = scalar_select %p310, %s28, 3
      %s312 = smul.addr %s311, 4
      %s313 = smul.addr %s312, 4
      %s314 = scalar_lea.vmem %s2, %s313
      %p315 = pneg %p85
      %p316 = pneg %p82
      %p317 = scmp.lt.s32.totalorder %s28, 3
      %s318 = scalar_select %p317, %s28, 3
      %s319 = scalar_lea.vmem %s3, %s318
      %p320 = pneg %p111
      %p321 = pneg %p108
      %p322 = scmp.lt.s32.totalorder %s28, 3
      %s323 = scalar_select %p322, %s28, 3
      %s324 = smul.addr %s323, 16
      %s325 = smul.addr %s324, 4
      %s326 = scalar_lea.vmem %s4, %s325
      %p327 = pneg %p137
      %p328 = pneg %p134
      %p329 = scmp.lt.s32.totalorder %s28, 3
      %s330 = scalar_select %p329, %s28, 3
      %s331 = scalar_lea.vmem %s5, %s330
      %p332 = pneg %p163
      %p333 = pneg %p160
      %s334 = smul.u32 16, %s29
      %p335 = scmp.lt.s32.totalorder %s28, 3
      %s336 = scalar_select %p335, %s28, 3
      %p337 = scmp.lt.s32.totalorder %s334, 15
      %s338 = scalar_select %p337, %s334, 15
      %s339 = smul.addr %s336, 16
      %s340 = sadd.s32 %s338, %s339
      %s341 = smul.addr %s340, 8
      %s342 = scalar_lea.vmem %s6, %s341
      %p343 = pneg %p191
      %p344 = pneg %p188
      %p345 = pneg %p219
      %p346 = pneg %p216
      %s347 = smul.u32 16, %s29
      %p348 = scmp.lt.s32.totalorder %s28, 3
      %s349 = scalar_select %p348, %s28, 3
      %p350 = scmp.lt.s32.totalorder %s347, 15
      %s351 = scalar_select %p350, %s347, 15
      %s352 = smul.addr %s349, 16
      %s353 = sadd.s32 %s351, %s352
      %s354 = smul.addr %s353, 8
      %s355 = scalar_lea.vmem %s7, %s354
      %s356 = smul.u32 16, %s29
      %p357 = scmp.lt.s32.totalorder %s28, 3
      %s358 = scalar_select %p357, %s28, 3
      %p359 = scmp.lt.s32.totalorder %s356, 15
      %s360 = scalar_select %p359, %s356, 15
      %s361 = smul.addr %s358, 16
      %s362 = sadd.s32 %s360, %s361
      %s363 = smul.addr %s362, 4
      %s364 = scalar_lea.vmem %s1, %s363
      %s365 = smul.u32 16, %s29
      %p366 = scmp.lt.s32.totalorder %s28, 3
      %s367 = scalar_select %p366, %s28, 3
      %s368 = smul.addr %s367, 4
      %s369 = smul.addr %s368, 4
      %s370 = scalar_lea.vmem %s2, %s369
      %p371 = scmp.lt.s32.totalorder %s28, 3
      %s372 = scalar_select %p371, %s28, 3
      %s373 = scalar_lea.vmem %s3, %s372
      %p374 = scmp.lt.s32.totalorder %s28, 3
      %s375 = scalar_select %p374, %s28, 3
      %s376 = smul.addr %s375, 16
      %s377 = smul.addr %s376, 4
      %s378 = scalar_lea.vmem %s4, %s377
      %p379 = scmp.lt.s32.totalorder %s28, 3
      %s380 = scalar_select %p379, %s28, 3
      %s381 = scalar_lea.vmem %s5, %s380
      %s382 = smul.u32 16, %s29
      %p383 = scmp.lt.s32.totalorder %s28, 3
      %s384 = scalar_select %p383, %s28, 3
      %p385 = scmp.lt.s32.totalorder %s382, 15
      %s386 = scalar_select %p385, %s382, 15
      %s387 = smul.addr %s384, 16
      %s388 = sadd.s32 %s386, %s387
      %s389 = smul.addr %s388, 8
      %s390 = scalar_lea.vmem %s6, %s389
      %s391 = smul.u32 16, %s29
      %s392 = smul.u32 16, %s29
      %p393 = scmp.lt.s32.totalorder %s28, 3
      %s394 = scalar_select %p393, %s28, 3
      %p395 = scmp.lt.s32.totalorder %s392, 15
      %s396 = scalar_select %p395, %s392, 15
      %s397 = smul.addr %s394, 16
      %s398 = sadd.s32 %s396, %s397
      %s399 = smul.addr %s398, 8
      %s400 = scalar_lea.vmem %s7, %s399
      %s401 = smul.u32 16, %s29
      %s403 = smul.u32 %s29, 128
      %s404 = sld [smem:[#allocation3 + %s28]]
      %p405 = scmp.lt.s32.totalorder %s403, %s404
      // Predicated region
      $region45: #{switch_moe_forward.1} parent=43 // pred_check
        %p406 = pneg %p405
      $region46: #{switch_moe_forward.1} parent=43 // pred_check_branch
        %408 = sbr.rel (%p406) target = $region48
      $region47: #{switch_moe_forward.1} parent=43 // pred_region
        %v409 = vld [vmem:[%s364] sm:$0xf]
        %v410 = vld [vmem:[%s364 + $0x4] sm:$0xf]
        %v411 = vld [vmem:[%s364 + $0x8] sm:$0xf]
        %v412 = vld [vmem:[%s364 + $0xc] sm:$0xf]
        %v413 = vld [vmem:[%s364 + $0x10] sm:$0xf]
        %v414 = vld [vmem:[%s364 + $0x14] sm:$0xf]
        %v415 = vld [vmem:[%s364 + $0x18] sm:$0xf]
        %v416 = vld [vmem:[%s364 + $0x1c] sm:$0xf]
        %v417 = vld [vmem:[%s364 + $0x20] sm:$0xf]
        %v418 = vld [vmem:[%s364 + $0x24] sm:$0xf]
        %v419 = vld [vmem:[%s364 + $0x28] sm:$0xf]
        %v420 = vld [vmem:[%s364 + $0x2c] sm:$0xf]
        %v421 = vld [vmem:[%s364 + $0x30] sm:$0xf]
        %v422 = vld [vmem:[%s364 + $0x34] sm:$0xf]
        %v423 = vld [vmem:[%s364 + $0x38] sm:$0xf]
        %v424 = vld [vmem:[%s364 + $0x3c] sm:$0xf]
        %v425 = vld [vmem:[%s370] sm:$0xf]
        %v426 = vld [vmem:[%s370 + $0x4] sm:$0xf]
        %v427 = vld [vmem:[%s370 + $0x8] sm:$0xf]
        %v428 = vld [vmem:[%s370 + $0xc] sm:$0xf]
        %v429 = vld [vmem:[%s373] sm:$0x1]
        %v431 = vlaneseq
        %v432 = vshrl.u32 %v431, 7
        %v433 = vsub.s32 0, %v432
        %v434 = vrot.slane %v429, %v433
        %v452 = vunpack.c.l.b16 %v409
        %v453 = vunpack.c.l.b16 %v410
        %v454 = vunpack.c.l.b16 %v411
        %v455 = vunpack.c.l.b16 %v412
        %v456 = vunpack.c.l.b16 %v413
        %v457 = vunpack.c.l.b16 %v414
        %v458 = vunpack.c.l.b16 %v415
        %v459 = vunpack.c.l.b16 %v416
        %v460 = vunpack.c.l.b16 %v417
        %v461 = vunpack.c.l.b16 %v418
        %v462 = vunpack.c.l.b16 %v419
        %v463 = vunpack.c.l.b16 %v420
        %v464 = vunpack.c.l.b16 %v421
        %v465 = vunpack.c.l.b16 %v422
        %v466 = vunpack.c.l.b16 %v423
        %v467 = vunpack.c.l.b16 %v424
        %v468 = vpack.c.b16 %v453, %v452
        %v469 = vpack.c.b16 %v455, %v454
        %v470 = vpack.c.b16 %v457, %v456
        %v471 = vpack.c.b16 %v459, %v458
        %v472 = vpack.c.b16 %v461, %v460
        %v473 = vpack.c.b16 %v463, %v462
        %v474 = vpack.c.b16 %v465, %v464
        %v475 = vpack.c.b16 %v467, %v466
        %v480 = vunpack.c.l.b16 %v425
        %v481 = vunpack.c.l.b16 %v426
        %v482 = vunpack.c.l.b16 %v427
        %v483 = vunpack.c.l.b16 %v428
        %v484 = vpack.c.b16 %v481, %v480
        %v485 = vpack.c.b16 %v483, %v482
        %vm488 = vcmask 261120
        %v490 = vsel %vm488, %v468, 0
        %v493 = vsel %vm488, %v469, 0
        %v496 = vsel %vm488, %v470, 0
        %v499 = vsel %vm488, %v471, 0
        %v502 = vsel %vm488, %v472, 0
        %v505 = vsel %vm488, %v473, 0
        %v508 = vsel %vm488, %v474, 0
        %v511 = vsel %vm488, %v475, 0
        %513 = vmatprep.subr.bf16.mxu0 0
        %514 = vmatpush1.bf16.msra.mxu0 0
        %515 = vmatprep.subr.bf16.mxu0 0
        %516 = vmatpush1.bf16.msra.mxu0 0
        %517 = vmatprep.subr.bf16.mxu0 0
        %518 = vmatpush1.bf16.msra.mxu0 0
        %519 = vmatprep.subr.bf16.mxu0 0
        %520 = vmatpush1.bf16.msra.mxu0 0
        %521 = vmatprep.subr.bf16.mxu0 0
        %522 = vmatpush1.bf16.msra.mxu0 0
        %523 = vmatprep.subr.bf16.mxu0 0
        %524 = vmatpush1.bf16.msra.mxu0 0
        %525 = vmatprep.subr.bf16.mxu0 0
        %526 = vmatpush1.bf16.msra.mxu0 %v485
        %527 = vmatprep.subr.bf16.mxu0 0
        %528 = vmatpush1.bf16.msra.mxu0 %v484
        %529 = vmatprep.subr.bf16.mxu0 0
        %530 = vmatpush2.bf16.msra.mxu0 0
        %531 = vmatprep.subr.bf16.mxu0 0
        %532 = vmatpush2.bf16.msra.mxu0 0
        %533 = vmatprep.subr.bf16.mxu0 0
        %534 = vmatpush2.bf16.msra.mxu0 0
        %535 = vmatprep.subr.bf16.mxu0 0
        %536 = vmatpush2.bf16.msra.mxu0 0
        %537 = vmatprep.subr.bf16.mxu0 0
        %538 = vmatpush2.bf16.msra.mxu0 0
        %539 = vmatprep.subr.bf16.mxu0 0
        %540 = vmatpush2.bf16.msra.mxu0 0
        %541 = vmatprep.subr.bf16.mxu0 0
        %542 = vmatpush2.bf16.msra.mxu0 0
        %543 = vmatprep.subr.bf16.mxu0 0
        %544 = vmatpush2.bf16.msra.mxu0 0
        %545 = vmatprep.mubr.bf16.mxu0 0
        %546 = vmatmul.mubr.bf16.gmra.mxu0 %v490
        %v547 = vpop.f32.mrf.mxu0
        %v548 = vadd.f32 %v434, %v547
        %v549 = vpop.f32.mrf.mxu0
        %v550 = vpop.f32.mrf.mxu0
        %v551 = vadd.f32 %v434, %v550
        %v552 = vpop.f32.mrf.mxu0
        %553 = vmatprep.mubr.bf16.mxu0 0
        %554 = vmatmul.mubr.bf16.gmra.mxu0 %v493
        %v555 = vpop.f32.mrf.mxu0
        %v556 = vadd.f32 %v434, %v555
        %v557 = vpop.f32.mrf.mxu0
        %v558 = vpop.f32.mrf.mxu0
        %v559 = vadd.f32 %v434, %v558
        %v560 = vpop.f32.mrf.mxu0
        %561 = vmatprep.mubr.bf16.mxu0 0
        %562 = vmatmul.mubr.bf16.gmra.mxu0 %v496
        %v563 = vpop.f32.mrf.mxu0
        %v564 = vadd.f32 %v434, %v563
        %v565 = vpop.f32.mrf.mxu0
        %v566 = vpop.f32.mrf.mxu0
        %v567 = vadd.f32 %v434, %v566
        %v568 = vpop.f32.mrf.mxu0
        %569 = vmatprep.mubr.bf16.mxu0 0
        %570 = vmatmul.mubr.bf16.gmra.mxu0 %v499
        %v571 = vpop.f32.mrf.mxu0
        %v572 = vadd.f32 %v434, %v571
        %v573 = vpop.f32.mrf.mxu0
        %v574 = vpop.f32.mrf.mxu0
        %v575 = vadd.f32 %v434, %v574
        %v576 = vpop.f32.mrf.mxu0
        %577 = vmatprep.mubr.bf16.mxu0 0
        %578 = vmatmul.mubr.bf16.gmra.mxu0 %v502
        %v579 = vpop.f32.mrf.mxu0
        %v580 = vadd.f32 %v434, %v579
        %v581 = vpop.f32.mrf.mxu0
        %v582 = vpop.f32.mrf.mxu0
        %v583 = vadd.f32 %v434, %v582
        %v584 = vpop.f32.mrf.mxu0
        %585 = vmatprep.mubr.bf16.mxu0 0
        %586 = vmatmul.mubr.bf16.gmra.mxu0 %v505
        %v587 = vpop.f32.mrf.mxu0
        %v588 = vadd.f32 %v434, %v587
        %v589 = vpop.f32.mrf.mxu0
        %v590 = vpop.f32.mrf.mxu0
        %v591 = vadd.f32 %v434, %v590
        %v592 = vpop.f32.mrf.mxu0
        %593 = vmatprep.mubr.bf16.mxu0 0
        %594 = vmatmul.mubr.bf16.gmra.mxu0 %v508
        %v595 = vpop.f32.mrf.mxu0
        %v596 = vadd.f32 %v434, %v595
        %v597 = vpop.f32.mrf.mxu0
        %v598 = vpop.f32.mrf.mxu0
        %v599 = vadd.f32 %v434, %v598
        %v600 = vpop.f32.mrf.mxu0
        %601 = vmatprep.mubr.bf16.mxu0 0
        %602 = vmatmul.mubr.bf16.gmra.mxu0 %v511
        %v603 = vpop.f32.mrf.mxu0
        %v604 = vadd.f32 %v434, %v603
        %v605 = vpop.f32.mrf.mxu0
        %v606 = vpop.f32.mrf.mxu0
        %v607 = vadd.f32 %v434, %v606
        %v608 = vpop.f32.mrf.mxu0
        %609 = vdwg.mxu0
        %v610 = vmul.f32 %v548, 0.5
        %v611 = vmul.f32 %v551, 0.5
        %v612 = vmul.f32 %v556, 0.5
        %v613 = vmul.f32 %v559, 0.5
        %v614 = vmul.f32 %v564, 0.5
        %v615 = vmul.f32 %v567, 0.5
        %v616 = vmul.f32 %v572, 0.5
        %v617 = vmul.f32 %v575, 0.5
        %v618 = vmul.f32 %v580, 0.5
        %v619 = vmul.f32 %v583, 0.5
        %v620 = vmul.f32 %v588, 0.5
        %v621 = vmul.f32 %v591, 0.5
        %v622 = vmul.f32 %v596, 0.5
        %v623 = vmul.f32 %v599, 0.5
        %v624 = vmul.f32 %v604, 0.5
        %v625 = vmul.f32 %v607, 0.5
        %v626 = vmul.f32 %v548, 0.044715
        %v627 = vmul.f32 %v551, 0.044715
        %v628 = vmul.f32 %v556, 0.044715
        %v629 = vmul.f32 %v559, 0.044715
        %v630 = vmul.f32 %v564, 0.044715
        %v631 = vmul.f32 %v567, 0.044715
        %v632 = vmul.f32 %v572, 0.044715
        %v633 = vmul.f32 %v575, 0.044715
        %v634 = vmul.f32 %v580, 0.044715
        %v635 = vmul.f32 %v583, 0.044715
        %v636 = vmul.f32 %v588, 0.044715
        %v637 = vmul.f32 %v591, 0.044715
        %v638 = vmul.f32 %v596, 0.044715
        %v639 = vmul.f32 %v599, 0.044715
        %v640 = vmul.f32 %v604, 0.044715
        %v641 = vmul.f32 %v607, 0.044715
        %v642 = vmul.f32 %v626, %v548
        %v643 = vmul.f32 %v627, %v551
        %v644 = vmul.f32 %v628, %v556
        %v645 = vmul.f32 %v629, %v559
        %v646 = vmul.f32 %v630, %v564
        %v647 = vmul.f32 %v631, %v567
        %v648 = vmul.f32 %v632, %v572
        %v649 = vmul.f32 %v633, %v575
        %v650 = vmul.f32 %v634, %v580
        %v651 = vmul.f32 %v635, %v583
        %v652 = vmul.f32 %v636, %v588
        %v653 = vmul.f32 %v637, %v591
        %v654 = vmul.f32 %v638, %v596
        %v655 = vmul.f32 %v639, %v599
        %v656 = vmul.f32 %v640, %v604
        %v657 = vmul.f32 %v641, %v607
        %v658 = vmul.f32 %v642, %v548
        %v659 = vmul.f32 %v643, %v551
        %v660 = vmul.f32 %v644, %v556
        %v661 = vmul.f32 %v645, %v559
        %v662 = vmul.f32 %v646, %v564
        %v663 = vmul.f32 %v647, %v567
        %v664 = vmul.f32 %v648, %v572
        %v665 = vmul.f32 %v649, %v575
        %v666 = vmul.f32 %v650, %v580
        %v667 = vmul.f32 %v651, %v583
        %v668 = vmul.f32 %v652, %v588
        %v669 = vmul.f32 %v653, %v591
        %v670 = vmul.f32 %v654, %v596
        %v671 = vmul.f32 %v655, %v599
        %v672 = vmul.f32 %v656, %v604
        %v673 = vmul.f32 %v657, %v607
        %v674 = vadd.f32 %v548, %v658
        %v675 = vadd.f32 %v551, %v659
        %v676 = vadd.f32 %v556, %v660
        %v677 = vadd.f32 %v559, %v661
        %v678 = vadd.f32 %v564, %v662
        %v679 = vadd.f32 %v567, %v663
        %v680 = vadd.f32 %v572, %v664
        %v681 = vadd.f32 %v575, %v665
        %v682 = vadd.f32 %v580, %v666
        %v683 = vadd.f32 %v583, %v667
        %v684 = vadd.f32 %v588, %v668
        %v685 = vadd.f32 %v591, %v669
        %v686 = vadd.f32 %v596, %v670
        %v687 = vadd.f32 %v599, %v671
        %v688 = vadd.f32 %v604, %v672
        %v689 = vadd.f32 %v607, %v673
        %v690 = vmul.f32 %v674, 0.7978846
        %v691 = vmul.f32 %v675, 0.7978846
        %v692 = vmul.f32 %v676, 0.7978846
        %v693 = vmul.f32 %v677, 0.7978846
        %v694 = vmul.f32 %v678, 0.7978846
        %v695 = vmul.f32 %v679, 0.7978846
        %v696 = vmul.f32 %v680, 0.7978846
        %v697 = vmul.f32 %v681, 0.7978846
        %v698 = vmul.f32 %v682, 0.7978846
        %v699 = vmul.f32 %v683, 0.7978846
        %v700 = vmul.f32 %v684, 0.7978846
        %v701 = vmul.f32 %v685, 0.7978846
        %v702 = vmul.f32 %v686, 0.7978846
        %v703 = vmul.f32 %v687, 0.7978846
        %v704 = vmul.f32 %v688, 0.7978846
        %v705 = vmul.f32 %v689, 0.7978846
        %v706 = vtanh.pop %v690
        %v707 = vtanh.pop %v691
        %v708 = vtanh.pop %v692
        %v709 = vtanh.pop %v693
        %v710 = vtanh.pop %v694
        %v711 = vtanh.pop %v695
        %v712 = vtanh.pop %v696
        %v713 = vtanh.pop %v697
        %v714 = vtanh.pop %v698
        %v715 = vtanh.pop %v699
        %v716 = vtanh.pop %v700
        %v717 = vtanh.pop %v701
        %v718 = vtanh.pop %v702
        %v719 = vtanh.pop %v703
        %v720 = vtanh.pop %v704
        %v721 = vtanh.pop %v705
        %v722 = vadd.f32 %v706, 1.0
        %v723 = vadd.f32 %v707, 1.0
        %v724 = vadd.f32 %v708, 1.0
        %v725 = vadd.f32 %v709, 1.0
        %v726 = vadd.f32 %v710, 1.0
        %v727 = vadd.f32 %v711, 1.0
        %v728 = vadd.f32 %v712, 1.0
        %v729 = vadd.f32 %v713, 1.0
        %v730 = vadd.f32 %v714, 1.0
        %v731 = vadd.f32 %v715, 1.0
        %v732 = vadd.f32 %v716, 1.0
        %v733 = vadd.f32 %v717, 1.0
        %v734 = vadd.f32 %v718, 1.0
        %v735 = vadd.f32 %v719, 1.0
        %v736 = vadd.f32 %v720, 1.0
        %v737 = vadd.f32 %v721, 1.0
        %v738 = vmul.f32 %v610, %v722
        %v739 = vmul.f32 %v611, %v723
        %v740 = vmul.f32 %v612, %v724
        %v741 = vmul.f32 %v613, %v725
        %v742 = vmul.f32 %v614, %v726
        %v743 = vmul.f32 %v615, %v727
        %v744 = vmul.f32 %v616, %v728
        %v745 = vmul.f32 %v617, %v729
        %v746 = vmul.f32 %v618, %v730
        %v747 = vmul.f32 %v619, %v731
        %v748 = vmul.f32 %v620, %v732
        %v749 = vmul.f32 %v621, %v733
        %v750 = vmul.f32 %v622, %v734
        %v751 = vmul.f32 %v623, %v735
        %v752 = vmul.f32 %v624, %v736
        %v753 = vmul.f32 %v625, %v737
        %v754 = vpack.c.bf16 %v739, %v738
        %v755 = vpack.c.bf16 %v741, %v740
        %v756 = vpack.c.bf16 %v743, %v742
        %v757 = vpack.c.bf16 %v745, %v744
        %v758 = vpack.c.bf16 %v747, %v746
        %v759 = vpack.c.bf16 %v749, %v748
        %v760 = vpack.c.bf16 %v751, %v750
        %v761 = vpack.c.bf16 %v753, %v752
        %v762 = vld [vmem:[%s378] sm:$0xf]
        %v763 = vld [vmem:[%s378 + $0x4] sm:$0xf]
        %v764 = vld [vmem:[%s378 + $0x8] sm:$0xf]
        %v765 = vld [vmem:[%s378 + $0xc] sm:$0xf]
        %v766 = vld [vmem:[%s378 + $0x10] sm:$0xf]
        %v767 = vld [vmem:[%s378 + $0x14] sm:$0xf]
        %v768 = vld [vmem:[%s378 + $0x18] sm:$0xf]
        %v769 = vld [vmem:[%s378 + $0x1c] sm:$0xf]
        %v770 = vld [vmem:[%s378 + $0x20] sm:$0xf]
        %v771 = vld [vmem:[%s378 + $0x24] sm:$0xf]
        %v772 = vld [vmem:[%s378 + $0x28] sm:$0xf]
        %v773 = vld [vmem:[%s378 + $0x2c] sm:$0xf]
        %v774 = vld [vmem:[%s378 + $0x30] sm:$0xf]
        %v775 = vld [vmem:[%s378 + $0x34] sm:$0xf]
        %v776 = vld [vmem:[%s378 + $0x38] sm:$0xf]
        %v777 = vld [vmem:[%s378 + $0x3c] sm:$0xf]
        %v778 = vld [vmem:[%s390] sm:$0xff]
        %v779 = vld [vmem:[%s390 + $0x8] sm:$0xff]
        %v780 = vld [vmem:[%s390 + $0x10] sm:$0xff]
        %v781 = vld [vmem:[%s390 + $0x18] sm:$0xff]
        %v782 = vld [vmem:[%s390 + $0x20] sm:$0xff]
        %v783 = vld [vmem:[%s390 + $0x28] sm:$0xff]
        %v784 = vld [vmem:[%s390 + $0x30] sm:$0xff]
        %v785 = vld [vmem:[%s390 + $0x38] sm:$0xff]
        %v786 = vld [vmem:[%s390 + $0x40] sm:$0xff]
        %v787 = vld [vmem:[%s390 + $0x48] sm:$0xff]
        %v788 = vld [vmem:[%s390 + $0x50] sm:$0xff]
        %v789 = vld [vmem:[%s390 + $0x58] sm:$0xff]
        %v790 = vld [vmem:[%s390 + $0x60] sm:$0xff]
        %v791 = vld [vmem:[%s390 + $0x68] sm:$0xff]
        %v792 = vld [vmem:[%s390 + $0x70] sm:$0xff]
        %v793 = vld [vmem:[%s390 + $0x78] sm:$0xff]
        %v794 = vld [vmem:[%s381] sm:$0x1]
        %v796 = vlaneseq
        %v797 = vshrl.u32 %v796, 7
        %v798 = vsub.s32 0, %v797
        %v799 = vrot.slane %v794, %v798
        %v817 = vunpack.c.l.b16 %v762
        %v818 = vunpack.c.l.b16 %v763
        %v819 = vunpack.c.l.b16 %v764
        %v820 = vunpack.c.l.b16 %v765
        %v821 = vunpack.c.l.b16 %v766
        %v822 = vunpack.c.l.b16 %v767
        %v823 = vunpack.c.l.b16 %v768
        %v824 = vunpack.c.l.b16 %v769
        %v825 = vunpack.c.l.b16 %v770
        %v826 = vunpack.c.l.b16 %v771
        %v827 = vunpack.c.l.b16 %v772
        %v828 = vunpack.c.l.b16 %v773
        %v829 = vunpack.c.l.b16 %v774
        %v830 = vunpack.c.l.b16 %v775
        %v831 = vunpack.c.l.b16 %v776
        %v832 = vunpack.c.l.b16 %v777
        %v833 = vpack.c.b16 %v818, %v817
        %v834 = vpack.c.b16 %v820, %v819
        %v835 = vpack.c.b16 %v822, %v821
        %v836 = vpack.c.b16 %v824, %v823
        %v837 = vpack.c.b16 %v826, %v825
        %v838 = vpack.c.b16 %v828, %v827
        %v839 = vpack.c.b16 %v830, %v829
        %v840 = vpack.c.b16 %v832, %v831
        %849 = vmatprep.subr.bf16.mxu0 0
        %850 = vmatpush1.bf16.msra.mxu0 %v840
        %851 = vmatprep.subr.bf16.mxu0 0
        %852 = vmatpush1.bf16.msra.mxu0 %v839
        %853 = vmatprep.subr.bf16.mxu0 0
        %854 = vmatpush1.bf16.msra.mxu0 %v838
        %855 = vmatprep.subr.bf16.mxu0 0
        %856 = vmatpush1.bf16.msra.mxu0 %v837
        %857 = vmatprep.subr.bf16.mxu0 0
        %858 = vmatpush1.bf16.msra.mxu0 %v836
        %859 = vmatprep.subr.bf16.mxu0 0
        %860 = vmatpush1.bf16.msra.mxu0 %v835
        %861 = vmatprep.subr.bf16.mxu0 0
        %862 = vmatpush1.bf16.msra.mxu0 %v834
        %863 = vmatprep.subr.bf16.mxu0 0
        %864 = vmatpush1.bf16.msra.mxu0 %v833
        %865 = vmatprep.subr.bf16.mxu0 0
        %866 = vmatpush2.bf16.msra.mxu0 0
        %867 = vmatprep.subr.bf16.mxu0 0
        %868 = vmatpush2.bf16.msra.mxu0 0
        %869 = vmatprep.subr.bf16.mxu0 0
        %870 = vmatpush2.bf16.msra.mxu0 0
        %871 = vmatprep.subr.bf16.mxu0 0
        %872 = vmatpush2.bf16.msra.mxu0 0
        %873 = vmatprep.subr.bf16.mxu0 0
        %874 = vmatpush2.bf16.msra.mxu0 0
        %875 = vmatprep.subr.bf16.mxu0 0
        %876 = vmatpush2.bf16.msra.mxu0 0
        %877 = vmatprep.subr.bf16.mxu0 0
        %878 = vmatpush2.bf16.msra.mxu0 0
        %879 = vmatprep.subr.bf16.mxu0 0
        %880 = vmatpush2.bf16.msra.mxu0 0
        %881 = vmatprep.mubr.bf16.mxu0 0
        %882 = vmatmul.mubr.bf16.gmra.mxu0 %v754
        %v883 = vpop.f32.mrf.mxu0
        %v884 = vadd.f32 %v799, %v883
        %v885 = vpop.f32.mrf.mxu0
        %v886 = vpop.f32.mrf.mxu0
        %v887 = vadd.f32 %v799, %v886
        %v888 = vpop.f32.mrf.mxu0
        %889 = vmatprep.mubr.bf16.mxu0 0
        %890 = vmatmul.mubr.bf16.gmra.mxu0 %v755
        %v891 = vpop.f32.mrf.mxu0
        %v892 = vadd.f32 %v799, %v891
        %v893 = vpop.f32.mrf.mxu0
        %v894 = vpop.f32.mrf.mxu0
        %v895 = vadd.f32 %v799, %v894
        %v896 = vpop.f32.mrf.mxu0
        %897 = vmatprep.mubr.bf16.mxu0 0
        %898 = vmatmul.mubr.bf16.gmra.mxu0 %v756
        %v899 = vpop.f32.mrf.mxu0
        %v900 = vadd.f32 %v799, %v899
        %v901 = vpop.f32.mrf.mxu0
        %v902 = vpop.f32.mrf.mxu0
        %v903 = vadd.f32 %v799, %v902
        %v904 = vpop.f32.mrf.mxu0
        %905 = vmatprep.mubr.bf16.mxu0 0
        %906 = vmatmul.mubr.bf16.gmra.mxu0 %v757
        %v907 = vpop.f32.mrf.mxu0
        %v908 = vadd.f32 %v799, %v907
        %v909 = vpop.f32.mrf.mxu0
        %v910 = vpop.f32.mrf.mxu0
        %v911 = vadd.f32 %v799, %v910
        %v912 = vpop.f32.mrf.mxu0
        %913 = vmatprep.mubr.bf16.mxu0 0
        %914 = vmatmul.mubr.bf16.gmra.mxu0 %v758
        %v915 = vpop.f32.mrf.mxu0
        %v916 = vadd.f32 %v799, %v915
        %v917 = vpop.f32.mrf.mxu0
        %v918 = vpop.f32.mrf.mxu0
        %v919 = vadd.f32 %v799, %v918
        %v920 = vpop.f32.mrf.mxu0
        %921 = vmatprep.mubr.bf16.mxu0 0
        %922 = vmatmul.mubr.bf16.gmra.mxu0 %v759
        %v923 = vpop.f32.mrf.mxu0
        %v924 = vadd.f32 %v799, %v923
        %v925 = vpop.f32.mrf.mxu0
        %v926 = vpop.f32.mrf.mxu0
        %v927 = vadd.f32 %v799, %v926
        %v928 = vpop.f32.mrf.mxu0
        %929 = vmatprep.mubr.bf16.mxu0 0
        %930 = vmatmul.mubr.bf16.gmra.mxu0 %v760
        %v931 = vpop.f32.mrf.mxu0
        %v932 = vadd.f32 %v799, %v931
        %v933 = vpop.f32.mrf.mxu0
        %v934 = vpop.f32.mrf.mxu0
        %v935 = vadd.f32 %v799, %v934
        %v936 = vpop.f32.mrf.mxu0
        %937 = vmatprep.mubr.bf16.mxu0 0
        %938 = vmatmul.mubr.bf16.gmra.mxu0 %v761
        %v939 = vpop.f32.mrf.mxu0
        %v940 = vadd.f32 %v799, %v939
        %v941 = vpop.f32.mrf.mxu0
        %v942 = vpop.f32.mrf.mxu0
        %v943 = vadd.f32 %v799, %v942
        %v944 = vpop.f32.mrf.mxu0
        %945 = vdwg.mxu0
        %947 = vset.pattern.permute.xlu0 0
        %948 = vperm.xlu0 %947, %v778
        %v949 = vpop.permute.xlu0 %948
        %952 = vset.pattern.permute.xlu0 0
        %953 = vperm.xlu0 %952, %v779
        %v954 = vpop.permute.xlu0 %953
        %957 = vset.pattern.permute.xlu0 0
        %958 = vperm.xlu0 %957, %v780
        %v959 = vpop.permute.xlu0 %958
        %962 = vset.pattern.permute.xlu0 0
        %963 = vperm.xlu0 %962, %v781
        %v964 = vpop.permute.xlu0 %963
        %967 = vset.pattern.permute.xlu0 0
        %968 = vperm.xlu0 %967, %v782
        %v969 = vpop.permute.xlu0 %968
        %972 = vset.pattern.permute.xlu0 0
        %973 = vperm.xlu0 %972, %v783
        %v974 = vpop.permute.xlu0 %973
        %977 = vset.pattern.permute.xlu0 0
        %978 = vperm.xlu0 %977, %v784
        %v979 = vpop.permute.xlu0 %978
        %982 = vset.pattern.permute.xlu0 0
        %983 = vperm.xlu0 %982, %v785
        %v984 = vpop.permute.xlu0 %983
        %987 = vset.pattern.permute.xlu0 0
        %988 = vperm.xlu0 %987, %v786
        %v989 = vpop.permute.xlu0 %988
        %992 = vset.pattern.permute.xlu0 0
        %993 = vperm.xlu0 %992, %v787
        %v994 = vpop.permute.xlu0 %993
        %997 = vset.pattern.permute.xlu0 0
        %998 = vperm.xlu0 %997, %v788
        %v999 = vpop.permute.xlu0 %998
        %1002 = vset.pattern.permute.xlu0 0
        %1003 = vperm.xlu0 %1002, %v789
        %v1004 = vpop.permute.xlu0 %1003
        %1007 = vset.pattern.permute.xlu0 0
        %1008 = vperm.xlu0 %1007, %v790
        %v1009 = vpop.permute.xlu0 %1008
        %1012 = vset.pattern.permute.xlu0 0
        %1013 = vperm.xlu0 %1012, %v791
        %v1014 = vpop.permute.xlu0 %1013
        %1017 = vset.pattern.permute.xlu0 0
        %1018 = vperm.xlu0 %1017, %v792
        %v1019 = vpop.permute.xlu0 %1018
        %1022 = vset.pattern.permute.xlu0 0
        %1023 = vperm.xlu0 %1022, %v793
        %v1024 = vpop.permute.xlu0 %1023
        %v1026 = vmul.f32 %v949, %v884
        %v1027 = vmul.f32 %v954, %v887
        %v1028 = vmul.f32 %v959, %v892
        %v1029 = vmul.f32 %v964, %v895
        %v1030 = vmul.f32 %v969, %v900
        %v1031 = vmul.f32 %v974, %v903
        %v1032 = vmul.f32 %v979, %v908
        %v1033 = vmul.f32 %v984, %v911
        %v1034 = vmul.f32 %v989, %v916
        %v1035 = vmul.f32 %v994, %v919
        %v1036 = vmul.f32 %v999, %v924
        %v1037 = vmul.f32 %v1004, %v927
        %v1038 = vmul.f32 %v1009, %v932
        %v1039 = vmul.f32 %v1014, %v935
        %v1040 = vmul.f32 %v1019, %v940
        %v1041 = vmul.f32 %v1024, %v943
        %1042 = vst.msk [vmem:[%s400] sm:$0xff] %vm488, %v1026
        %1043 = vst.msk [vmem:[%s400 + $0x8] sm:$0xff] %vm488, %v1027
        %1044 = vst.msk [vmem:[%s400 + $0x10] sm:$0xff] %vm488, %v1028
        %1045 = vst.msk [vmem:[%s400 + $0x18] sm:$0xff] %vm488, %v1029
        %1046 = vst.msk [vmem:[%s400 + $0x20] sm:$0xff] %vm488, %v1030
        %1047 = vst.msk [vmem:[%s400 + $0x28] sm:$0xff] %vm488, %v1031
        %1048 = vst.msk [vmem:[%s400 + $0x30] sm:$0xff] %vm488, %v1032
        %1049 = vst.msk [vmem:[%s400 + $0x38] sm:$0xff] %vm488, %v1033
        %1050 = vst.msk [vmem:[%s400 + $0x40] sm:$0xff] %vm488, %v1034
        %1051 = vst.msk [vmem:[%s400 + $0x48] sm:$0xff] %vm488, %v1035
        %1052 = vst.msk [vmem:[%s400 + $0x50] sm:$0xff] %vm488, %v1036
        %1053 = vst.msk [vmem:[%s400 + $0x58] sm:$0xff] %vm488, %v1037
        %1054 = vst.msk [vmem:[%s400 + $0x60] sm:$0xff] %vm488, %v1038
        %1055 = vst.msk [vmem:[%s400 + $0x68] sm:$0xff] %vm488, %v1039
        %1056 = vst.msk [vmem:[%s400 + $0x70] sm:$0xff] %vm488, %v1040
        %1057 = vst.msk [vmem:[%s400 + $0x78] sm:$0xff] %vm488, %v1041
      $region48: #{switch_moe_forward.1} parent=43 // pred_fallthru
        _
      %p1058 = scmp.ge.s32.totalorder %s403, %s404
      // Predicated region
      $region49: #{switch_moe_forward.1} parent=43 // pred_check
        %p1059 = pneg %p1058
      $region50: #{switch_moe_forward.1} parent=43 // pred_check_branch
        %1061 = sbr.rel (%p1059) target = $region52
      $region51: #{switch_moe_forward.1} parent=43 // pred_region
        %vm1062 = vcmask 261120
        %1063 = vst.msk [vmem:[%s400] sm:$0xff] %vm1062, 0.0
        %1064 = vst.msk [vmem:[%s400 + $0x8] sm:$0xff] %vm1062, 0.0
        %1065 = vst.msk [vmem:[%s400 + $0x10] sm:$0xff] %vm1062, 0.0
        %1066 = vst.msk [vmem:[%s400 + $0x18] sm:$0xff] %vm1062, 0.0
        %1067 = vst.msk [vmem:[%s400 + $0x20] sm:$0xff] %vm1062, 0.0
        %1068 = vst.msk [vmem:[%s400 + $0x28] sm:$0xff] %vm1062, 0.0
        %1069 = vst.msk [vmem:[%s400 + $0x30] sm:$0xff] %vm1062, 0.0
        %1070 = vst.msk [vmem:[%s400 + $0x38] sm:$0xff] %vm1062, 0.0
        %1071 = vst.msk [vmem:[%s400 + $0x40] sm:$0xff] %vm1062, 0.0
        %1072 = vst.msk [vmem:[%s400 + $0x48] sm:$0xff] %vm1062, 0.0
        %1073 = vst.msk [vmem:[%s400 + $0x50] sm:$0xff] %vm1062, 0.0
        %1074 = vst.msk [vmem:[%s400 + $0x58] sm:$0xff] %vm1062, 0.0
        %1075 = vst.msk [vmem:[%s400 + $0x60] sm:$0xff] %vm1062, 0.0
        %1076 = vst.msk [vmem:[%s400 + $0x68] sm:$0xff] %vm1062, 0.0
        %1077 = vst.msk [vmem:[%s400 + $0x70] sm:$0xff] %vm1062, 0.0
        %1078 = vst.msk [vmem:[%s400 + $0x78] sm:$0xff] %vm1062, 0.0
      $region52: #{switch_moe_forward.1} parent=43 // pred_fallthru
        _
      %s1079 = smul.u32 16, %s29
      %p1080 = scmp.lt.s32.totalorder %s28, 3
      %s1081 = scalar_select %p1080, %s28, 3
      %p1082 = scmp.lt.s32.totalorder %s1079, 15
      %s1083 = scalar_select %p1082, %s1079, 15
      %s1084 = smul.addr %s1081, 16
      %s1085 = sadd.s32 %s1083, %s1084
      %s1086 = smul.addr %s1085, 8
      %s1087 = scalar_lea.vmem %s7, %s1086
      // Predicated region
      $region53: #{switch_moe_forward.1} parent=43 // pred_check
        %p1088 = pneg %p216
      $region54: #{switch_moe_forward.1} parent=43 // pred_check_branch
        %1090 = sbr.rel (%p1088) target = $region56
      $region55: #{switch_moe_forward.1} parent=43 // pred_region
        %s1091 = smul.u32 16, %s29
      $region56: #{switch_moe_forward.1} parent=43 // pred_fallthru
        _
    $region44: #{switch_moe_forward.1} parent=5 // pred_fallthru
      _
    %p1092 = scmp.le.s32.totalorder 2, %s19
    // Predicated region
    $region57: #{switch_moe_forward.1} parent=5 // pred_check
      %p1093 = pneg %p1092
    $region58: #{switch_moe_forward.1} parent=5 // pred_check_branch
      %1095 = sbr.rel (%p1093) target = $region60
    $region59: #{switch_moe_forward.1} parent=5 // pred_region
      %s1096 = ssub.s32 %s19, 2
      // Predicated region
      $region61: #{switch_moe_forward.1} parent=59 // pred_check
        %p1097 = pneg %p222
      $region62: #{switch_moe_forward.1} parent=59 // pred_check_branch
        %1099 = sbr.rel (%p1097) target = $region64
      $region63: #{switch_moe_forward.1} parent=59 // pred_region
        %s1100 = smul.u32 16, %s31
        %p1101 = scmp.lt.s32.totalorder %s30, 3
        %s1102 = scalar_select %p1101, %s30, 3
        %p1103 = scmp.lt.s32.totalorder %s1100, 15
        %s1104 = scalar_select %p1103, %s1100, 15
        %s1105 = smul.addr %s1102, 16
        %s1106 = sadd.s32 %s1104, %s1105
        %s1107 = smul.addr %s1106, 8
        %s1108 = scalar_lea.vmem %s7, %s1107
      $region64: #{switch_moe_forward.1} parent=59 // pred_fallthru
        _
    $region60: #{switch_moe_forward.1} parent=5 // pred_fallthru
      _
  $region6: #{switch_moe_forward.1} parent=0 // loop_footer
    %s23 = sadd.s32 1, %s19
  $region7: #{switch_moe_forward.1} parent=0 // loop_footer_branch
    %18 = sbr.rel target = $region3
  $region8: #{switch_moe_forward.1} parent=0 // loop_exit
    _

</llo_original>
